<compile_context>
chip_gen: v5e
topology: v5e:2x2
jax: 0.10.0
libtpu: 0.0.40
codegen_flags: <defaults>
</compile_context>

<pallas_src>
import jax
import jax.numpy as jnp
from jax.experimental import pallas as pl
from jax.experimental.pallas import tpu as pltpu


def _channel_pad_kernel(x_ref, o_ref, *, lin, lpad):
    # Copy region: leading lin lanes come straight from the input tile.
    o_ref[:, :lin] = x_ref[...]
    # Zero region: trailing lpad lanes are constructed zeros (never read from
    # the uninitialized output buffer). Each output element is written once.
    if lpad > 0:
        bn = o_ref.shape[0]
        o_ref[:, lin:] = jnp.zeros((bn, lpad), dtype=o_ref.dtype)


def _vmem_capacity_bytes():
    """Physical VMEM of the attached chip; conservative v7x default if unknown."""
    try:
        info = pltpu.get_tpu_info()
        cap = getattr(info, "vmem_capacity_bytes", None)
        if cap:
            return int(cap)
    except Exception:
        pass
    return 64 * 1024 * 1024  # v7x floor; v5e/v6e have 128 MiB


def channel_padding(x, channels):
    """Zero-pad x (N, C, H, W) along the channel axis up to `channels` channels."""
    N, C, H, W = x.shape
    assert channels >= C, "target channels must be >= input channels"
    HW = H * W
    lin = C * HW            # input lanes per batch element
    lout = channels * HW    # output lanes per batch element
    itemsize = jnp.dtype(x.dtype).itemsize

    # Sublane multiple for the second-to-last block dim: 8 for f32, 16 for
    # bf16/f16, 32 for int8/fp8. Only matters when bn < N (ragged batch tiling).
    sublane = max(8, 32 // itemsize)

    # Lane-dense 2D layout.
    x2 = x.reshape(N, lin)

    # --- Tiling policy (per-generation, VMEM-budget driven) -------------------
    # Requested scoped VMEM: half of physical, capped at 64 MiB.
    #   v7x (64 MiB phys)  -> 32 MiB scoped
    #   v5e/v6e (128 MiB)  -> 64 MiB scoped
    vmem_cap = _vmem_capacity_bytes()
    vmem_limit = min(vmem_cap // 2, 64 * 1024 * 1024)

    # Per grid step the pipeline double-buffers (input + output) blocks; keep
    # one step's blocks to ~1/3 of the scoped limit to leave headroom.
    per_batch_bytes = (lin + lout) * itemsize
    budget = max(1, vmem_limit // 3)
    cap = max(1, budget // max(1, per_batch_bytes))

    if cap >= N or N <= sublane:
        # Whole batch fits (or is tiny): one big block, full-extent batch dim.
        bn = N
    else:
        # Largest sublane-aligned batch block under the budget; ragged final
        # block (if any) is clipped/masked by Pallas.
        bn = max(sublane, (cap // sublane) * sublane)
        bn = min(bn, N)

    grid = (pl.cdiv(N, bn),)
    # ---------------------------------------------------------------------------

    kernel = lambda x_ref, o_ref: _channel_pad_kernel(
        x_ref, o_ref, lin=lin, lpad=lout - lin)

    bytes_accessed = (N * lin + N * lout) * itemsize

    out = pl.pallas_call(
        kernel,
        out_shape=jax.ShapeDtypeStruct((N, lout), x.dtype),
        grid_spec=pltpu.PrefetchScalarGridSpec(
            num_scalar_prefetch=0,
            grid=grid,
            in_specs=[pl.BlockSpec((bn, lin), lambda n: (n, 0))],
            out_specs=pl.BlockSpec((bn, lout), lambda n: (n, 0)),
        ),
        compiler_params=pltpu.CompilerParams(
            dimension_semantics=("parallel",),
            vmem_limit_bytes=vmem_limit,
        ),
        cost_estimate=pl.CostEstimate(
            flops=0, transcendentals=0, bytes_accessed=bytes_accessed),
    )(x2)

    return out.reshape(N, channels, H, W)


if __name__ == "__main__":
    key = jax.random.PRNGKey(0)
    N, C_in, H, W = 2, 4, 16, 16
    target_channels = 8  # ChannelPadding(channels=8)

    x = jax.random.normal(key, (N, C_in, H, W), dtype=jnp.float32)

    out = channel_padding(x, target_channels)
    out = jax.block_until_ready(out)

    # Reference check (plain JAX): zero-pad along channel dim.
    ref = jnp.pad(x, ((0, 0), (0, target_channels - C_in), (0, 0), (0, 0)))
    assert out.shape == (N, target_channels, H, W)
    assert out.dtype == x.dtype
    assert bool(jnp.allclose(out, ref))

    print("KERNEL_OK")
</pallas_src>

<mosaic_0001>
module attributes {stable_mosaic.version = 11 : i64} {
  func.func @_lambda_(%arg0: i32, %arg1: memref<2x1024xf32, #tpu.memory_space<vmem>>, %arg2: memref<2x2048xf32, #tpu.memory_space<vmem>>) attributes {dimension_semantics = [#tpu.dimension_semantics<parallel>], iteration_bounds = array<i64: 1>, scalar_prefetch = 0 : i64, scratch_operands = 0 : i64, tpu.core_type = #tpu.core_type<tc>, window_params = [{transform_indices = @transform_0, window_bounds = array<i64: 2, 1024>}, {transform_indices = @transform_1, window_bounds = array<i64: 2, 2048>}]} {
    %c0 = arith.constant 0 : index
    %c0_0 = arith.constant 0 : index
    %0 = vector.load %arg1[%c0, %c0_0] : memref<2x1024xf32, #tpu.memory_space<vmem>>, vector<2x1024xf32>
    %c0_1 = arith.constant 0 : index
    %c0_2 = arith.constant 0 : index
    %1 = vector.load %arg2[%c0_1, %c0_2] : memref<2x2048xf32, #tpu.memory_space<vmem>>, vector<2x1024xf32>
    tpu.vector_store %arg2[%c0_1, %c0_2], %0 {strides = array<i32>} : memref<2x2048xf32, #tpu.memory_space<vmem>>, vector<2x1024xf32>,
    %cst = arith.constant 0.000000e+00 : f32
    %2 = vector.broadcast %cst : f32 to vector<2x1024xf32>
    %c0_3 = arith.constant 0 : index
    %c1024 = arith.constant 1024 : index
    %3 = vector.load %arg2[%c0_3, %c1024] : memref<2x2048xf32, #tpu.memory_space<vmem>>, vector<2x1024xf32>
    tpu.vector_store %arg2[%c0_3, %c1024], %2 {strides = array<i32>} : memref<2x2048xf32, #tpu.memory_space<vmem>>, vector<2x1024xf32>,
    return
  }
  func.func @transform_0(%arg0: i32) -> (i32, i32) {
    %c0_i32 = arith.constant 0 : i32
    %c0_i32_0 = arith.constant 0 : i32
    return %arg0, %c0_i32 : i32, i32
  }
  func.func @transform_1(%arg0: i32) -> (i32, i32) {
    %c0_i32 = arith.constant 0 : i32
    %c0_i32_0 = arith.constant 0 : i32
    return %arg0, %c0_i32 : i32, i32
  }
}

</mosaic_0001>

<llo_original>
// kernel: tpu_custom_call.1
$region0: #{tpu_custom_call.1}
  #allocation0 [shape = 'u32[]', space=smem, size = 0x4, offset = 0x4, fixed_abs, tag = 'smem constant byte address 0x4 - core index']
  #allocation1 [shape = 'u32[72,128]{1,0:T(1,128)}', space=vmem, size = 0x9000, scoped, tag = 'internal scratch']
  %s0 = inlined_call_operand.hbm [shape: f32[2,1024], index: 0, kind: input, shape index: {}]
  %s1 = inlined_call_operand.hbm [shape: f32[2,2048], index: 1, kind: output, shape index: {}]
  %s2 = sld [smem:[#allocation0]]
  $region18: #{tpu_custom_call.1} parent=0
    _
  %s4 = ssub.s32 1, %s2
  %s5 = scalar_select 0, %s4, %s2
  $region1: #{tpu_custom_call.1} parent=0
    #allocation2 [shape = 'u8[8192]{0}', space=vmem, size = 0x2000, scoped, tag = 'input window, operand 0, single buffered']
    #allocation3 [shape = 's32[1]{0}', space=sflag, size = 0x4, scoped, tag = 'scoped memory for tpu_custom_call.1']
    #allocation4 [shape = 's32[1]{0}', space=sflag, size = 0x4, scoped, tag = 'scoped memory for tpu_custom_call.1']
    #allocation5 [shape = 'u8[16384]{0}', space=vmem, size = 0x4000, scoped, tag = 'output window, operand 0, single buffered']
    %6 = vsyncpa [#allocation3], 0
    %7 = vsyncpa [#allocation4], 0
    // Predicated region
    $region2: #{tpu_custom_call.1} parent=1 // pred_check
      _
    $region3: #{tpu_custom_call.1} parent=1 // pred_check_branch
      %9 = sbr.rel (0) target = $region5
    $region4: #{tpu_custom_call.1} parent=1 // pred_region
      %11 = vsyncadd [#allocation3], 0
      %s13 = sshll.u32 %s0, 4
      %s14 = int_to_ptr.hbm [resolvable:$true] %s13
      %s15 = sshll.u32 [#allocation2], 4
      %s16 = int_to_ptr.vmem [resolvable:$true] %s15
      %18 = dma.hbm_to_vmem [thread:$0]  %s14, 256, %s16, [#allocation3]
    $region5: #{tpu_custom_call.1} parent=1 // pred_fallthru
      _
    // Predicated region
    $region6: #{tpu_custom_call.1} parent=1 // pred_check
      _
    $region7: #{tpu_custom_call.1} parent=1 // pred_check_branch
      %20 = sbr.rel (0) target = $region9
    $region8: #{tpu_custom_call.1} parent=1 // pred_region
      %22 = dma.done [#allocation3], 256
    $region9: #{tpu_custom_call.1} parent=1 // pred_fallthru
      _
    %v23 = vld [vmem:[#allocation2] sm:$0xff]
    %v24 = vld [vmem:[#allocation2 + $0x8] sm:$0xff]
    %25 = vst [vmem:[#allocation5] sm:$0xff] %v23
    %26 = vst [vmem:[#allocation5 + $0x8] sm:$0xff] %v24
    %27 = vst [vmem:[#allocation5 + $0x10] sm:$0xff] 0.0
    %28 = vst [vmem:[#allocation5 + $0x18] sm:$0xff] 0.0
    // Predicated region
    $region10: #{tpu_custom_call.1} parent=1 // pred_check
      _
    $region11: #{tpu_custom_call.1} parent=1 // pred_check_branch
      %30 = sbr.rel (0) target = $region13
    $region12: #{tpu_custom_call.1} parent=1 // pred_region
      %32 = vsyncadd [#allocation4], 0
      %s34 = sshll.u32 [#allocation5], 4
      %s35 = int_to_ptr.vmem [resolvable:$true] %s34
      %s36 = sshll.u32 %s1, 4
      %s37 = int_to_ptr.hbm [resolvable:$true] %s36
      %39 = dma.vmem_to_hbm [thread:$0]  %s35, 512, %s37, [#allocation4]
    $region13: #{tpu_custom_call.1} parent=1 // pred_fallthru
      _
    // Predicated region
    $region14: #{tpu_custom_call.1} parent=1 // pred_check
      _
    $region15: #{tpu_custom_call.1} parent=1 // pred_check_branch
      %41 = sbr.rel (0) target = $region17
    $region16: #{tpu_custom_call.1} parent=1 // pred_region
      %43 = dma.done [#allocation4], 512
    $region17: #{tpu_custom_call.1} parent=1 // pred_fallthru
      _
    %44 = vsyncpa [#allocation3], 1
    %45 = vsyncpa [#allocation4], 1

</llo_original>
